<compile_context>
chip_gen: v7x
topology: tpu7x:2x2x1
jax: 0.10.0
libtpu: 0.0.40
codegen_flags: <defaults>
</compile_context>

<pallas_src>
import functools

import jax
import jax.numpy as jnp
from jax import lax
from jax.experimental import pallas as pl
from jax.experimental.pallas import tpu as pltpu


# ---------------------------------------------------------------------------
# Kernels
# ---------------------------------------------------------------------------

def _sce_kernel(x_ref, t_ref, w_ref, o_ref):
    """Elementwise loss tile: blocks are (1, C, T_HW); weights are (1, C, 1)."""
    x = x_ref[...].astype(jnp.float32)          # (1, C, T)
    t = t_ref[...].astype(jnp.float32)          # (1, C, T)
    w = w_ref[...].astype(jnp.float32)          # (1, C, 1) -> broadcasts over lanes

    # Numerically-stable log-softmax over the class (sublane) axis.
    m = jnp.max(x, axis=1, keepdims=True)
    shifted = x - m
    lse = jnp.log(jnp.sum(jnp.exp(shifted), axis=1, keepdims=True))
    logprobs = shifted - lse

    o_ref[...] = (-(w * t * logprobs)).astype(o_ref.dtype)


def _sce_sum_kernel(x_ref, t_ref, w_ref, o_ref, *, hw, tile_hw):
    """Accumulates the weighted loss into a per-sample scalar (resident over the HW axis)."""
    j = pl.program_id(1)

    x = x_ref[...].astype(jnp.float32)          # (1, C, T)
    t = t_ref[...].astype(jnp.float32)
    w = w_ref[...].astype(jnp.float32)          # (1, C, 1)

    m = jnp.max(x, axis=1, keepdims=True)
    shifted = x - m
    lse = jnp.log(jnp.sum(jnp.exp(shifted), axis=1, keepdims=True))
    logprobs = shifted - lse
    contrib = -(w * t * logprobs)               # (1, C, T)

    # Mask lanes past the true H*W extent (partial last block reads garbage).
    lane = lax.broadcasted_iota(jnp.int32, contrib.shape, 2)
    valid = (j * tile_hw + lane) < hw
    contrib = jnp.where(valid, contrib, 0.0)
    partial = jnp.sum(contrib)

    @pl.when(j == 0)
    def _():
        o_ref[...] = jnp.zeros_like(o_ref)

    o_ref[...] += partial


# ---------------------------------------------------------------------------
# Tiling / wrapper
# ---------------------------------------------------------------------------

def _pick_tile_hw(hw, c, n):
    """Lane-dense tile along H*W: multiple of 128 (or == hw), capped by a VMEM budget."""
    if hw <= 128:
        return hw
    # ~2 MiB of f32 compute per array block; with (x, t, out) double-buffered this keeps
    # the footprint comfortably under v7x's 64 MiB VMEM while tiles stay large.
    max_lanes = max(128, (2 * 1024 * 1024) // (c * 4))
    t = min(hw, max_lanes)
    if n == 1:
        # Keep at least 2 grid steps so both TensorCores on v7x get work.
        t = min(t, max(128, -(-hw // 2)))
    return max(128, (t // 128) * 128)


def soft_cross_entropy(inp, target, weight=None, reduction="none"):
    """JAX/Pallas equivalent of the PyTorch soft_cross_entropy.

    inp, target: [N, C, ...]; weight: [C] or None.
    """
    assert inp.shape == target.shape
    N, C = inp.shape[:2]
    spatial = inp.shape[2:]
    HW = 1
    for d in spatial:
        HW *= d

    # Free metadata-only reshape (no transpose, no copy): channel stays second,
    # all spatial dims collapse onto the lane axis.
    x3 = inp.reshape(N, C, HW)
    t3 = target.reshape(N, C, HW)

    if weight is None:
        w3 = jnp.ones((1, C, 1), dtype=jnp.float32)
    else:
        w3 = jnp.asarray(weight, dtype=jnp.float32).reshape(1, C, 1)

    T = _pick_tile_hw(HW, C, N)
    grid = (N, pl.cdiv(HW, T))

    in_specs = [
        pl.BlockSpec((1, C, T), lambda n, j: (n, 0, j)),
        pl.BlockSpec((1, C, T), lambda n, j: (n, 0, j)),
        pl.BlockSpec((1, C, 1), lambda n, j: (0, 0, 0)),   # resident class weights
    ]
    cp_kwargs = dict(vmem_limit_bytes=32 * 1024 * 1024)

    if reduction == "none":
        out3 = pl.pallas_call(
            _sce_kernel,
            out_shape=jax.ShapeDtypeStruct((N, C, HW), inp.dtype),
            grid_spec=pltpu.PrefetchScalarGridSpec(
                num_scalar_prefetch=0,
                grid=grid,
                in_specs=in_specs,
                out_specs=pl.BlockSpec((1, C, T), lambda n, j: (n, 0, j)),
            ),
            compiler_params=pltpu.CompilerParams(
                dimension_semantics=("parallel", "parallel"), **cp_kwargs),
        )(x3, t3, w3)
        return out3.reshape((N, C) + spatial)

    elif reduction in ("sum", "mean"):
        kernel = functools.partial(_sce_sum_kernel, hw=HW, tile_hw=T)
        partials = pl.pallas_call(
            kernel,
            out_shape=jax.ShapeDtypeStruct((N, 1, 1), jnp.float32),
            grid_spec=pltpu.PrefetchScalarGridSpec(
                num_scalar_prefetch=0,
                grid=grid,
                in_specs=in_specs,
                out_specs=pl.BlockSpec((1, 1, 1), lambda n, j: (n, 0, 0)),
            ),
            compiler_params=pltpu.CompilerParams(
                dimension_semantics=("parallel", "arbitrary"), **cp_kwargs),
        )(x3, t3, w3)
        total = jnp.sum(partials)
        if reduction == "sum":
            return total
        return total / (inp.size / C)

    else:
        raise ValueError(f"unknown reduction: {reduction}")


class SoftCrossEntropy:
    def __init__(self, weight=None, reduction="none"):
        self.weight = weight
        self.reduction = reduction

    def __call__(self, inp, target):
        return soft_cross_entropy(inp, target, self.weight, self.reduction)


# ---------------------------------------------------------------------------
# Reference + self-test
# ---------------------------------------------------------------------------

def _reference(inp, target, weight=None, reduction="none"):
    """Pure-JAX reference mirroring the PyTorch code."""
    N, C = inp.shape[:2]
    logprobs = jax.nn.log_softmax(inp.astype(jnp.float32), axis=1)
    if weight is None:
        weight = jnp.ones((C,), dtype=jnp.float32)
    w = weight.reshape((1, C) + (1,) * (inp.ndim - 2)).astype(jnp.float32)
    out = -(w * target.astype(jnp.float32) * logprobs)
    if reduction == "none":
        return out
    elif reduction == "sum":
        return jnp.sum(out)
    elif reduction == "mean":
        return jnp.sum(out) / (inp.size / C)


if __name__ == "__main__":
    key = jax.random.PRNGKey(0)
    k1, k2 = jax.random.split(key, 2)

    N, C, H, W = 2, 4, 16, 16
    x = jax.random.normal(k1, (N, C, H, W), dtype=jnp.float32)
    # Target: a soft probability distribution over the class axis (dim=1).
    t_logits = jax.random.normal(k2, (N, C, H, W), dtype=jnp.float32)
    t = jax.nn.softmax(t_logits, axis=1)
    # Deterministic per-class weights.
    w = jnp.linspace(0.5, 2.0, C, dtype=jnp.float32)

    # reduction='none'
    out = jax.block_until_ready(SoftCrossEntropy(weight=w, reduction="none")(x, t))
    ref = _reference(x, t, w, "none")
    assert out.shape == (N, C, H, W)
    assert jnp.max(jnp.abs(out.astype(jnp.float32) - ref)) < 1e-5, "mismatch vs reference (none)"

    # reduction='mean' (in-kernel accumulation path)
    loss_mean = jax.block_until_ready(SoftCrossEntropy(weight=w, reduction="mean")(x, t))
    ref_mean = _reference(x, t, w, "mean")
    assert jnp.abs(loss_mean - ref_mean) < 1e-4, "mismatch vs reference (mean)"

    # reduction='sum'
    loss_sum = jax.block_until_ready(SoftCrossEntropy(weight=w, reduction="sum")(x, t))
    ref_sum = _reference(x, t, w, "sum")
    assert jnp.abs(loss_sum - ref_sum) / jnp.abs(ref_sum) < 1e-5, "mismatch vs reference (sum)"

    # no-weight path
    out_nw = jax.block_until_ready(SoftCrossEntropy(weight=None, reduction="none")(x, t))
    ref_nw = _reference(x, t, None, "none")
    assert jnp.max(jnp.abs(out_nw - ref_nw)) < 1e-5, "mismatch vs reference (no weight)"

    print("KERNEL_OK")
</pallas_src>

<mosaic_0001>
module attributes {stable_mosaic.version = 11 : i64} {
  func.func @_sce_kernel(%arg0: i32, %arg1: i32, %arg2: memref<1x4x256xf32, #tpu.memory_space<vmem>>, %arg3: memref<1x4x256xf32, #tpu.memory_space<vmem>>, %arg4: memref<1x4x1xf32, #tpu.memory_space<vmem>>, %arg5: memref<1x4x256xf32, #tpu.memory_space<vmem>>) attributes {dimension_semantics = [#tpu.dimension_semantics<parallel>, #tpu.dimension_semantics<parallel>], iteration_bounds = array<i64: 2, 1>, scalar_prefetch = 0 : i64, scratch_operands = 0 : i64, tpu.core_type = #tpu.core_type<tc>, window_params = [{transform_indices = @transform_0, window_bounds = array<i64: 1, 4, 256>}, {transform_indices = @transform_1, window_bounds = array<i64: 1, 4, 256>}, {pipeline_mode = #tpu.pipeline_mode<synchronous>, transform_indices = @transform_2, window_bounds = array<i64: 1, 4, 1>}, {transform_indices = @transform_3, window_bounds = array<i64: 1, 4, 256>}]} {
    %c0 = arith.constant 0 : index
    %c0_0 = arith.constant 0 : index
    %c0_1 = arith.constant 0 : index
    %0 = vector.load %arg2[%c0, %c0_0, %c0_1] : memref<1x4x256xf32, #tpu.memory_space<vmem>>, vector<1x4x256xf32>
    %c0_2 = arith.constant 0 : index
    %c0_3 = arith.constant 0 : index
    %c0_4 = arith.constant 0 : index
    %1 = vector.load %arg3[%c0_2, %c0_3, %c0_4] : memref<1x4x256xf32, #tpu.memory_space<vmem>>, vector<1x4x256xf32>
    %c0_5 = arith.constant 0 : index
    %c0_6 = arith.constant 0 : index
    %c0_7 = arith.constant 0 : index
    %2 = vector.load %arg4[%c0_5, %c0_6, %c0_7] : memref<1x4x1xf32, #tpu.memory_space<vmem>>, vector<1x4x1xf32>
    %cst = arith.constant dense<0xFF800000> : vector<1x256xf32>
    %3 = vector.multi_reduction <maximumf>, %0, %cst [1] : vector<1x4x256xf32> to vector<1x256xf32>
    %4 = vector.shape_cast %3 : vector<1x256xf32> to vector<1x1x256xf32>
    %5 = vector.broadcast %4 : vector<1x1x256xf32> to vector<1x4x256xf32>
    %6 = arith.subf %0, %5 : vector<1x4x256xf32>
    %7 = math.exp %6 : vector<1x4x256xf32>
    %cst_8 = arith.constant dense<0.000000e+00> : vector<1x256xf32>
    %8 = vector.multi_reduction <add>, %7, %cst_8 [1] : vector<1x4x256xf32> to vector<1x256xf32>
    %9 = vector.shape_cast %8 : vector<1x256xf32> to vector<1x1x256xf32>
    %10 = math.log %9 : vector<1x1x256xf32>
    %11 = vector.broadcast %10 : vector<1x1x256xf32> to vector<1x4x256xf32>
    %12 = arith.subf %6, %11 : vector<1x4x256xf32>
    %13 = vector.broadcast %2 : vector<1x4x1xf32> to vector<1x4x256xf32>
    %14 = arith.mulf %13, %1 : vector<1x4x256xf32>
    %15 = arith.mulf %14, %12 : vector<1x4x256xf32>
    %cst_9 = arith.constant 0.000000e+00 : f32
    %16 = vector.broadcast %cst_9 : f32 to vector<1x4x256xf32>
    %17 = arith.subf %16, %15 : vector<1x4x256xf32>
    %c0_10 = arith.constant 0 : index
    %c0_11 = arith.constant 0 : index
    %c0_12 = arith.constant 0 : index
    %18 = vector.load %arg5[%c0_10, %c0_11, %c0_12] : memref<1x4x256xf32, #tpu.memory_space<vmem>>, vector<1x4x256xf32>
    tpu.vector_store %arg5[%c0_10, %c0_11, %c0_12], %17 {strides = array<i32>} : memref<1x4x256xf32, #tpu.memory_space<vmem>>, vector<1x4x256xf32>,
    return
  }
  func.func @transform_0(%arg0: i32, %arg1: i32) -> (i32, i32, i32) {
    %c0_i32 = arith.constant 0 : i32
    %c0_i32_0 = arith.constant 0 : i32
    return %arg0, %c0_i32, %arg1 : i32, i32, i32
  }
  func.func @transform_1(%arg0: i32, %arg1: i32) -> (i32, i32, i32) {
    %c0_i32 = arith.constant 0 : i32
    %c0_i32_0 = arith.constant 0 : i32
    return %arg0, %c0_i32, %arg1 : i32, i32, i32
  }
  func.func @transform_2(%arg0: i32, %arg1: i32) -> (i32, i32, i32) {
    %c0_i32 = arith.constant 0 : i32
    %c0_i32_0 = arith.constant 0 : i32
    %c0_i32_1 = arith.constant 0 : i32
    %c0_i32_2 = arith.constant 0 : i32
    return %c0_i32, %c0_i32_0, %c0_i32_1 : i32, i32, i32
  }
  func.func @transform_3(%arg0: i32, %arg1: i32) -> (i32, i32, i32) {
    %c0_i32 = arith.constant 0 : i32
    %c0_i32_0 = arith.constant 0 : i32
    return %arg0, %c0_i32, %arg1 : i32, i32, i32
  }
}

</mosaic_0001>

<llo_original>
// kernel: tpu_custom_call.1
$region0: #{tpu_custom_call.1}
  #allocation0 [shape = 'u32[]', space=smem, size = 0x4, offset = 0x4, fixed_abs, tag = 'smem constant byte address 0x4 - core index']
  #allocation1 [shape = 'u32[144,128]{1,0:T(1,128)}', space=vmem, size = 0x12000, scoped, tag = 'internal scratch']
  %s0 = inlined_call_operand.hbm [shape: f32[2,4,256], index: 0, kind: input, shape index: {}]
  %s1 = inlined_call_operand.hbm [shape: f32[2,4,256], index: 1, kind: input, shape index: {}]
  %s2 = inlined_call_operand.vmem [shape: f32[1,4,1], index: 2, kind: input, shape index: {}]
  %s3 = inlined_call_operand.hbm [shape: f32[2,4,256], index: 3, kind: output, shape index: {}]
  %s4 = sld [smem:[#allocation0]]
  $region53: #{tpu_custom_call.1} parent=0
    _
  %s6 = ssub.s32 1, %s4
  %s7 = scalar_select 0, %s6, %s4
  $region1: #{tpu_custom_call.1} parent=0
    #allocation2 [shape = 'u8[8192]{0}', space=vmem, size = 0x2000, scoped, tag = 'input window, operand 0']
    #allocation3 [shape = 's32[2]{0}', space=sflag, size = 0x8, scoped, tag = 'scoped memory for tpu_custom_call.1']
    #allocation4 [shape = 's32[2]{0}', space=sflag, size = 0x8, scoped, tag = 'scoped memory for tpu_custom_call.1']
    #allocation5 [shape = 'u8[8192]{0}', space=vmem, size = 0x2000, scoped, tag = 'input window, operand 1']
    #allocation6 [shape = 's32[2]{0}', space=sflag, size = 0x8, scoped, tag = 'scoped memory for tpu_custom_call.1']
    #allocation7 [shape = 'u8[8192]{0}', space=vmem, size = 0x2000, scoped, tag = 'output window, operand 0']
    %8 = vsyncpa [#allocation3], 0
    %s9 = scalar_lea.sflag [#allocation3], 1
    %10 = vsyncpa %s9, 0
    %11 = vsyncpa [#allocation6], 0
    %s12 = scalar_lea.sflag [#allocation6], 1
    %13 = vsyncpa %s12, 0
    %14 = vsyncpa [#allocation4], 0
    %s15 = scalar_lea.sflag [#allocation4], 1
    %16 = vsyncpa %s15, 0
    loop: start=0, step=1, limit=4
    $region2: #{tpu_custom_call.1} parent=1 // loop_pre_header
      _
    $region3: #{tpu_custom_call.1} parent=1 // loop_header
      %s18 = sphi 0, %s22
      %p19 = scmp.ge.s32.totalorder %s18, 4
      %s25 = sphi 0, %s37
      %s26 = sphi 0, %s33
      %s27 = sphi 0, %s25
      %s28 = sphi 0, %s26
      %s29 = sphi 0, %s27
      %s30 = sphi 0, %s28
      %s42 = sphi 0, %s44
      %s45 = sphi 0, %s42
      %s46 = sphi 0, %s45
      %s62 = sphi 0, %s46
      %s70 = sphi 0, %s72
      %s73 = sphi 0, %s70
      %s74 = sphi 0, %s73
      %s90 = sphi 0, %s74
      %s94 = sphi 0, %s94
      %s96 = sphi 0, %s94
      %s97 = sphi 0, %s96
      %s111 = sphi 0, %s97
      %s119 = sphi 0, %s121
      %s122 = sphi 0, %s119
      %s123 = sphi 0, %s122
      %s139 = sphi 0, %s123
    $region4: #{tpu_custom_call.1} parent=1 // loop_header_branch
      %21 = sbr.rel (%p19) target = $region8
    $region5: #{tpu_custom_call.1} parent=1 // loop_body
      %s23 = ssub.s32 %s18, 1
      %s24 = ssub.s32 %s18, 2
      %s31 = sadd.s32 1, %s26
      %p32 = scmp.ge.s32.totalorder %s31, 1
      %s33 = scalar_select %p32, 0, %s31
      %s34 = sadd.s32 1, %s25
      %s35 = scalar_select %p32, %s34, %s25
      %p36 = scmp.ge.s32.totalorder %s35, 2
      %s37 = scalar_select %p36, 0, %s35
      %s38 = ssub.s32 %s25, %s37
      %s39 = ssub.s32 %s26, %s33
      %s40 = sor.u32 %s38, %s39
      %p41 = scmp.eq.s32.totalorder %s40, 0
      %s43 = sadd.s32 %s42, 1
      %s44 = scalar_select %p41, %s42, %s43
      %p47 = pneg %p41
      %p48 = scmp.eq.s32.totalorder %s18, 1
      %p49 = por %p47, %p48
      %p50 = scmp.ne.s32.totalorder %s42, %s45
      %p51 = scmp.eq.s32.totalorder %s18, 0
      %p52 = por %p50, %p51
      %p53 = scmp.ne.s32.totalorder %s42, %s45
      %p54 = scmp.eq.s32.totalorder %s23, 1
      %p55 = por %p53, %p54
      %p56 = scmp.ne.s32.totalorder %s45, %s46
      %p57 = scmp.eq.s32.totalorder %s23, 0
      %p58 = por %p56, %p57
      %p59 = scmp.ne.s32.totalorder %s45, %s46
      %p60 = scmp.eq.s32.totalorder %s24, 1
      %p61 = por %p59, %p60
      %p63 = scmp.ne.s32.totalorder %s46, %s62
      %p64 = scmp.eq.s32.totalorder %s24, 0
      %p65 = por %p63, %p64
      %s66 = ssub.s32 %s25, %s37
      %s67 = ssub.s32 %s26, %s33
      %s68 = sor.u32 %s66, %s67
      %p69 = scmp.eq.s32.totalorder %s68, 0
      %s71 = sadd.s32 %s70, 1
      %s72 = scalar_select %p69, %s70, %s71
      %p75 = pneg %p69
      %p76 = scmp.eq.s32.totalorder %s18, 1
      %p77 = por %p75, %p76
      %p78 = scmp.ne.s32.totalorder %s70, %s73
      %p79 = scmp.eq.s32.totalorder %s18, 0
      %p80 = por %p78, %p79
      %p81 = scmp.ne.s32.totalorder %s70, %s73
      %p82 = scmp.eq.s32.totalorder %s23, 1
      %p83 = por %p81, %p82
      %p84 = scmp.ne.s32.totalorder %s73, %s74
      %p85 = scmp.eq.s32.totalorder %s23, 0
      %p86 = por %p84, %p85
      %p87 = scmp.ne.s32.totalorder %s73, %s74
      %p88 = scmp.eq.s32.totalorder %s24, 1
      %p89 = por %p87, %p88
      %p91 = scmp.ne.s32.totalorder %s74, %s90
      %p92 = scmp.eq.s32.totalorder %s24, 0
      %p93 = por %p91, %p92
      %s95 = sadd.s32 %s94, 1
      %p98 = scmp.eq.s32.totalorder %s18, 1
      %p99 = scmp.ne.s32.totalorder %s94, %s96
      %p100 = scmp.eq.s32.totalorder %s18, 0
      %p101 = por %p99, %p100
      %p102 = scmp.ne.s32.totalorder %s94, %s96
      %p103 = scmp.eq.s32.totalorder %s23, 1
      %p104 = por %p102, %p103
      %p105 = scmp.ne.s32.totalorder %s96, %s97
      %p106 = scmp.eq.s32.totalorder %s23, 0
      %p107 = por %p105, %p106
      %p108 = scmp.ne.s32.totalorder %s96, %s97
      %p109 = scmp.eq.s32.totalorder %s24, 1
      %p110 = por %p108, %p109
      %p112 = scmp.ne.s32.totalorder %s97, %s111
      %p113 = scmp.eq.s32.totalorder %s24, 0
      %p114 = por %p112, %p113
      %s115 = ssub.s32 %s25, %s37
      %s116 = ssub.s32 %s26, %s33
      %s117 = sor.u32 %s115, %s116
      %p118 = scmp.eq.s32.totalorder %s117, 0
      %s120 = sadd.s32 %s119, 1
      %s121 = scalar_select %p118, %s119, %s120
      %p124 = pneg %p118
      %p125 = scmp.eq.s32.totalorder %s18, 1
      %p126 = por %p124, %p125
      %p127 = scmp.ne.s32.totalorder %s119, %s122
      %p128 = scmp.eq.s32.totalorder %s18, 0
      %p129 = por %p127, %p128
      %p130 = scmp.ne.s32.totalorder %s119, %s122
      %p131 = scmp.eq.s32.totalorder %s23, 1
      %p132 = por %p130, %p131
      %p133 = scmp.ne.s32.totalorder %s122, %s123
      %p134 = scmp.eq.s32.totalorder %s23, 0
      %p135 = por %p133, %p134
      %p136 = scmp.ne.s32.totalorder %s122, %s123
      %p137 = scmp.eq.s32.totalorder %s24, 1
      %p138 = por %p136, %p137
      %p140 = scmp.ne.s32.totalorder %s123, %s139
      %p141 = scmp.eq.s32.totalorder %s24, 0
      %p142 = por %p140, %p141
      %p143 = scmp.le.s32.totalorder 1, %s18
      %p144 = scmp.lt.s32.totalorder %s18, 3
      %p145 = pnand %p143, %p144
      %p146 = pneg %p145
      // Predicated region
      $region9: #{tpu_custom_call.1} parent=5 // pred_check
        _
      $region10: #{tpu_custom_call.1} parent=5 // pred_check_branch
        %148 = sbr.rel (%p145) target = $region12
      $region11: #{tpu_custom_call.1} parent=5 // pred_region
        %s149 = ssub.s32 %s18, 1
        // Predicated region
        $region13: #{tpu_custom_call.1} parent=11 // pred_check
          %p150 = pneg %p107
        $region14: #{tpu_custom_call.1} parent=11 // pred_check_branch
          %152 = sbr.rel (%p150) target = $region16
        $region15: #{tpu_custom_call.1} parent=11 // pred_region
          _
        $region16: #{tpu_custom_call.1} parent=11 // pred_fallthru
          _
      $region12: #{tpu_custom_call.1} parent=5 // pred_fallthru
        _
      %p153 = scmp.lt.s32.totalorder %s18, 2
      // Predicated region
      $region17: #{tpu_custom_call.1} parent=5 // pred_check
        %p154 = pneg %p153
      $region18: #{tpu_custom_call.1} parent=5 // pred_check_branch
        %156 = sbr.rel (%p154) target = $region20
      $region19: #{tpu_custom_call.1} parent=5 // pred_region
        // Predicated region
        $region21: #{tpu_custom_call.1} parent=19 // pred_check
          %p157 = pneg %p52
        $region22: #{tpu_custom_call.1} parent=19 // pred_check_branch
          %159 = sbr.rel (%p157) target = $region24
        $region23: #{tpu_custom_call.1} parent=19 // pred_region
          %s160 = sand.u32 %s42, 1
          %s161 = scalar_lea.sflag [#allocation3], %s160
          %s162 = sand.u32 %s42, 1
          %s163 = smul.addr %s162, 8
          %s164 = scalar_lea.vmem [#allocation2], %s163
          %s165 = smul.u32 2, %s26
          %s167 = ssub.s32 128, 128
          %168 = vsyncadd %s161, %s167
          %s169 = smul.addr %s25, 2
          %s170 = sadd.s32 %s165, %s169
          %s171 = smul.addr %s170, 64
          %s172 = scalar_lea.hbm %s0, %s171
          %s174 = sshll.u32 %s164, 4
          %s175 = int_to_ptr.vmem [resolvable:$true] %s174
          %177 = dma.hbm_to_vmem [thread:$0]  %s172, 128, %s175, %s161
        $region24: #{tpu_custom_call.1} parent=19 // pred_fallthru
          _
        // Predicated region
        $region25: #{tpu_custom_call.1} parent=19 // pred_check
          %p178 = pneg %p80
        $region26: #{tpu_custom_call.1} parent=19 // pred_check_branch
          %180 = sbr.rel (%p178) target = $region28
        $region27: #{tpu_custom_call.1} parent=19 // pred_region
          %s181 = sand.u32 %s70, 1
          %s182 = scalar_lea.sflag [#allocation6], %s181
          %s183 = sand.u32 %s70, 1
          %s184 = smul.addr %s183, 8
          %s185 = scalar_lea.vmem [#allocation5], %s184
          %s186 = smul.u32 2, %s26
          %s188 = ssub.s32 128, 128
          %189 = vsyncadd %s182, %s188
          %s190 = smul.addr %s25, 2
          %s191 = sadd.s32 %s186, %s190
          %s192 = smul.addr %s191, 64
          %s193 = scalar_lea.hbm %s1, %s192
          %s195 = sshll.u32 %s185, 4
          %s196 = int_to_ptr.vmem [resolvable:$true] %s195
          %198 = dma.hbm_to_vmem [thread:$0]  %s193, 128, %s196, %s182
        $region28: #{tpu_custom_call.1} parent=19 // pred_fallthru
          _
      $region20: #{tpu_custom_call.1} parent=5 // pred_fallthru
        _
      %p199 = scmp.le.s32.totalorder 1, %s18
      %p200 = scmp.lt.s32.totalorder %s18, 3
      %p201 = pnand %p199, %p200
      %p202 = pneg %p201
      // Predicated region
      $region29: #{tpu_custom_call.1} parent=5 // pred_check
        _
      $region30: #{tpu_custom_call.1} parent=5 // pred_check_branch
        %204 = sbr.rel (%p201) target = $region32
      $region31: #{tpu_custom_call.1} parent=5 // pred_region
        %s205 = ssub.s32 %s18, 1
        %s206 = sand.u32 %s45, 1
        %s207 = scalar_lea.sflag [#allocation3], %s206
        %s208 = sand.u32 %s45, 1
        %s209 = smul.addr %s208, 8
        %s210 = scalar_lea.vmem [#allocation2], %s209
        // Predicated region
        $region33: #{tpu_custom_call.1} parent=31 // pred_check
          %p211 = pneg %p58
        $region34: #{tpu_custom_call.1} parent=31 // pred_check_branch
          %213 = sbr.rel (%p211) target = $region36
        $region35: #{tpu_custom_call.1} parent=31 // pred_region
          %214 = dma.done %s207, 128
        $region36: #{tpu_custom_call.1} parent=31 // pred_fallthru
          _
        %s215 = sand.u32 %s73, 1
        %s216 = scalar_lea.sflag [#allocation6], %s215
        %s217 = sand.u32 %s73, 1
        %s218 = smul.addr %s217, 8
        %s219 = scalar_lea.vmem [#allocation5], %s218
        // Predicated region
        $region37: #{tpu_custom_call.1} parent=31 // pred_check
          %p220 = pneg %p86
        $region38: #{tpu_custom_call.1} parent=31 // pred_check_branch
          %222 = sbr.rel (%p220) target = $region40
        $region39: #{tpu_custom_call.1} parent=31 // pred_region
          %223 = dma.done %s216, 128
        $region40: #{tpu_custom_call.1} parent=31 // pred_fallthru
          _
        %s224 = sand.u32 %s45, 1
        %s225 = scalar_lea.sflag [#allocation3], %s224
        %s226 = sand.u32 %s45, 1
        %s227 = smul.addr %s226, 8
        %s228 = scalar_lea.vmem [#allocation2], %s227
        %p229 = pneg %p58
        %p230 = pneg %p55
        %s231 = sand.u32 %s73, 1
        %s232 = scalar_lea.sflag [#allocation6], %s231
        %s233 = sand.u32 %s73, 1
        %s234 = smul.addr %s233, 8
        %s235 = scalar_lea.vmem [#allocation5], %s234
        %p236 = pneg %p86
        %p237 = pneg %p83
        %p238 = pneg %p107
        %p239 = pneg %p104
        %p240 = pneg %p135
        %p241 = pneg %p132
        %s242 = sand.u32 %s122, 1
        %s243 = scalar_lea.sflag [#allocation4], %s242
        %s244 = sand.u32 %s122, 1
        %s245 = smul.addr %s244, 8
        %s246 = scalar_lea.vmem [#allocation7], %s245
        %s247 = smul.u32 2, %s28
        %s248 = smul.u32 2, %s28
        %s249 = smul.u32 2, %s28
        %v250 = vld [vmem:[%s210] sm:$0xff]
        %v251 = vld [vmem:[%s219] sm:$0xff]
        %v252 = vld [vmem:[%s2] sm:$0xf]
        %v254 = vcombine.high %v250, %v250
        %vm256 = vcmask 1043456
        %v257 = vsel %vm256, %v250, -inf
        %v258 = vrot.slane %v257, 4
        %v259 = vmax.f32 %v257, %v258
        %v260 = vrot.slane %v259, 2
        %v261 = vmax.f32 %v259, %v260
        %v262 = vrot.slane %v261, 1
        %v263 = vmax.f32 %v261, %v262
        %v264 = vsel %vm256, %v254, -inf
        %v265 = vrot.slane %v264, 4
        %v266 = vmax.f32 %v264, %v265
        %v267 = vrot.slane %v266, 2
        %v268 = vmax.f32 %v266, %v267
        %v269 = vrot.slane %v268, 1
        %v270 = vmax.f32 %v268, %v269
        %v273 = vcombine.low %v263, %v270
        %v275 = vsub.f32 %v250, %v273
        %v276 = vmul.f32 %v275, 1.442695
        %v277 = vpow.pop %v276
        %v279 = vcombine.high %v277, %v277
        %v281 = vsel %vm256, %v277, 0.0
        %v282 = vrot.slane %v281, 4
        %v283 = vadd.f32 %v281, %v282
        %v284 = vrot.slane %v283, 2
        %v285 = vadd.f32 %v283, %v284
        %v286 = vrot.slane %v285, 1
        %v287 = vadd.f32 %v285, %v286
        %v288 = vsel %vm256, %v279, 0.0
        %v289 = vrot.slane %v288, 4
        %v290 = vadd.f32 %v288, %v289
        %v291 = vrot.slane %v290, 2
        %v292 = vadd.f32 %v290, %v291
        %v293 = vrot.slane %v292, 1
        %v294 = vadd.f32 %v292, %v293
        %v295 = vlog2.pop %v287
        %v296 = vmul.f32 %v295, 0.6931472
        %v297 = vlog2.pop %v294
        %v298 = vmul.f32 %v297, 0.6931472
        %v301 = vcombine.low %v296, %v298
        %v303 = vsub.f32 %v275, %v301
        %305 = vset.pattern.permute.xlu0 0
        %306 = vperm.xlu0 %305, %v252
        %v307 = vpop.permute.xlu0 %306
        %v310 = vcombine.high %v251, %v251
        %v312 = vmul.f32 %v307, %v251
        %v313 = vmul.f32 %v307, %v310
        %v315 = vcombine.high %v303, %v303
        %v317 = vmul.f32 %v312, %v303
        %v318 = vmul.f32 %v313, %v315
        %v319 = vsub.f32 0.0, %v317
        %v320 = vsub.f32 0.0, %v318
        %v323 = vcombine.low %v319, %v320
        %325 = vst [vmem:[%s246] sm:$0xff] %v323
        %s326 = sand.u32 %s122, 1
        %s327 = scalar_lea.sflag [#allocation4], %s326
        %s328 = sand.u32 %s122, 1
        %s329 = smul.addr %s328, 8
        %s330 = scalar_lea.vmem [#allocation7], %s329
        // Predicated region
        $region41: #{tpu_custom_call.1} parent=31 // pred_check
          %p331 = pneg %p132
        $region42: #{tpu_custom_call.1} parent=31 // pred_check_branch
          %333 = sbr.rel (%p331) target = $region44
        $region43: #{tpu_custom_call.1} parent=31 // pred_region
          %s334 = smul.u32 2, %s28
          %s336 = ssub.s32 128, 128
          %337 = vsyncadd %s327, %s336
          %s338 = smul.addr %s27, 2
          %s339 = sadd.s32 %s334, %s338
          %s340 = smul.addr %s339, 64
          %s341 = scalar_lea.hbm %s3, %s340
          %s343 = sshll.u32 %s330, 4
          %s344 = int_to_ptr.vmem [resolvable:$true] %s343
          %346 = dma.vmem_to_hbm [thread:$0]  %s344, 128, %s341, %s327
        $region44: #{tpu_custom_call.1} parent=31 // pred_fallthru
          _
      $region32: #{tpu_custom_call.1} parent=5 // pred_fallthru
        _
      %p347 = scmp.le.s32.totalorder 2, %s18
      // Predicated region
      $region45: #{tpu_custom_call.1} parent=5 // pred_check
        %p348 = pneg %p347
      $region46: #{tpu_custom_call.1} parent=5 // pred_check_branch
        %350 = sbr.rel (%p348) target = $region48
      $region47: #{tpu_custom_call.1} parent=5 // pred_region
        %s351 = ssub.s32 %s18, 2
        // Predicated region
        $region49: #{tpu_custom_call.1} parent=47 // pred_check
          %p352 = pneg %p138
        $region50: #{tpu_custom_call.1} parent=47 // pred_check_branch
          %354 = sbr.rel (%p352) target = $region52
        $region51: #{tpu_custom_call.1} parent=47 // pred_region
          %s355 = sand.u32 %s123, 1
          %s356 = scalar_lea.sflag [#allocation4], %s355
          %s357 = sand.u32 %s123, 1
          %s358 = smul.addr %s357, 8
          %s359 = scalar_lea.vmem [#allocation7], %s358
          %360 = dma.done %s356, 128
        $region52: #{tpu_custom_call.1} parent=47 // pred_fallthru
          _
      $region48: #{tpu_custom_call.1} parent=5 // pred_fallthru
        _
    $region6: #{tpu_custom_call.1} parent=1 // loop_footer
      %s22 = sadd.s32 1, %s18
    $region7: #{tpu_custom_call.1} parent=1 // loop_footer_branch
      %17 = sbr.rel target = $region3
    $region8: #{tpu_custom_call.1} parent=1 // loop_exit
      _
    %361 = vsyncpa [#allocation3], 1
    %s362 = scalar_lea.sflag [#allocation3], 1
    %363 = vsyncpa %s362, 1
    %364 = vsyncpa [#allocation6], 1
    %s365 = scalar_lea.sflag [#allocation6], 1
    %366 = vsyncpa %s365, 1
    %367 = vsyncpa [#allocation4], 1
    %s368 = scalar_lea.sflag [#allocation4], 1
    %369 = vsyncpa %s368, 1

</llo_original>
